<compile_context>
chip_gen: v5e
topology: v5e:2x2
jax: 0.10.0
libtpu: 0.0.40
codegen_flags: <defaults>
</compile_context>

<pallas_src>
import jax
import jax.numpy as jnp
import numpy as np
from jax.experimental import pallas as pl
from jax.experimental.pallas import tpu as pltpu

# ---------------- module hyper-parameters (deterministic, in-script) ----------
KERNEL_EMBEDDING_DIM = 32
DIM_HIDDEN_LAYER_LIST = [32, 16]
NOISE_VARIANCE_LOWER_BOUND = 1e-4
USE_SCALED_SOFTPLUS = True
DROPOUT_P = 0.1  # dropout is identity in eval/inference -> not applied in kernel
NOISE_VARIANCE_EXPONENTIAL_LAMBDA = 10.0  # module-level constant in the repo

if USE_SCALED_SOFTPLUS:
    SCALE_BETA = 2.0
    SCALE_A = 0.1
else:
    SCALE_BETA = 1.0
    SCALE_A = 1.0
SOFTPLUS_THRESHOLD = 20.0  # matches torch.nn.Softplus default threshold

LANE = 128                    # TPU lane width
TARGET_BLOCK_BYTES = 4 << 20  # ~4 MiB per ke+mask buffer; double-buffered ~8 MiB fits
                              # v5e's 16 MiB scoped default and v7x's 64 MiB physical VMEM
VMEM_LIMIT_BYTES = 32 << 20   # headroom; <= physical VMEM on v5e/v6e/v7x


# ------------------------------ Pallas kernel --------------------------------
def noise_head_kernel(ke_ref, km_ref, w0p_ref, b0_ref, w1_ref, b1_ref,
                      wf_ref, bf_ref, un_ref):
    # ke_ref : (TB, M, W)  kernel embeddings packed to 128-lane rows, native dtype
    # km_ref : (TB, DN)    kernel mask
    # w0p_ref: (W, h0)     first-layer weight, row-replicated W//d_h times
    # wf_ref : (1, h1)     final-layer weight (pre-transposed), used on the VPU
    ke = ke_ref[...].astype(jnp.float32)
    km = km_ref[...].astype(jnp.float32)

    # masked kernel count; the clamp only guards 0/0 on ragged-tail rows (>= B),
    # which are discarded by the output DMA clipping. Real rows are unchanged.
    n_k = jnp.maximum(jnp.sum(km, axis=1, keepdims=True), 1.0)          # (TB, 1)

    # lane-dense reduction over the packed axis; the W -> d_h fold and the first
    # Linear are fused into a single MXU matmul against the row-replicated w0.
    # The /n_kernels row scaling commutes with the right-multiply.
    s = jnp.sum(ke, axis=1)                                             # (TB, W)
    h = jnp.dot(s, w0p_ref[...], preferred_element_type=jnp.float32) / n_k + b0_ref[...]
    h = jnp.maximum(h, 0.0)
    h = jnp.dot(h, w1_ref[...], preferred_element_type=jnp.float32) + b1_ref[...]
    h = jnp.maximum(h, 0.0)

    # final (h1 -> 1) layer on the VPU (broadcast-mul + row sum); MXU would be idle.
    un = jnp.sum(h * wf_ref[...], axis=1, keepdims=True) + bf_ref[...]
    un_ref[...] = un.astype(un_ref.dtype)


# ------------------------------ wrapper (glue) --------------------------------
def noise_variance_predictor_head(kernel_embeddings, kernel_mask,
                                  dimwise_dataset_encoding, dim_mask, params):
    """kernel_embeddings: (B, D, N_k, d_h); kernel_mask: (B, D, N_k).
    dimwise_dataset_encoding / dim_mask are unused by this head (API parity)."""
    del dimwise_dataset_encoding, dim_mask
    B, D, Nk, dh = kernel_embeddings.shape
    DN = D * Nk
    w0, b0, w1, b1, wf, bf = params

    # pack d_h into full 128-lane rows when shapes allow (free, contiguous reshape)
    if LANE % dh == 0 and (DN * dh) % LANE == 0:
        W = LANE
    else:
        # TODO(synk): for shapes where DN*d_h is not a multiple of 128, have the
        # producer pad DN once upstream; this 32-lane fallback wastes 4x VMEM/vld.
        W = dh
    M = (DN * dh) // W
    ke = kernel_embeddings.reshape(B, M, W)     # native dtype, streamed as-is (bf16 ok)
    km = kernel_mask.reshape(B, DN)

    # replicate w0 along its input dim so the packed (TB, W) sum feeds the MXU directly
    w0p = jnp.tile(w0, (W // dh, 1))            # (W, h0)
    wf_t = jnp.transpose(wf)                    # (1, h1)

    # ---- batch tile from a VMEM byte budget; NO padding of the embedding stream ----
    row_bytes = M * W * ke.dtype.itemsize + DN * km.dtype.itemsize
    tb_budget = max(8, (TARGET_BLOCK_BYTES // row_bytes) // 8 * 8)
    if B <= 16:
        TB = B                                                   # one full block
    elif B <= tb_budget:
        TB = min(tb_budget, 8 * pl.cdiv(pl.cdiv(B, 2), 8))       # >=2 steps for megacore
    else:
        TB = tb_budget
    grid = (pl.cdiv(B, TB),)
    # Ragged last block: Pallas clips the block DMAs at the array bounds. Garbage
    # only reaches rows >= B; their output writes are dropped and the n_kernels
    # clamp keeps them finite. No extra HBM traffic is incurred.

    def resident(shape):
        return pl.BlockSpec(shape, lambda i: (0, 0))   # weights stay VMEM-resident

    h0, h1 = w0.shape[1], w1.shape[1]
    flops = int(B * (M * W + DN + 2 * W * h0 + 2 * h0 * h1 + 2 * h1))
    bytes_accessed = int(ke.size * ke.dtype.itemsize + km.size * km.dtype.itemsize
                         + B * 4
                         + sum(int(p.size) * 4 for p in (w0p, b0, w1, b1, wf_t, bf)))

    un = pl.pallas_call(
        noise_head_kernel,
        out_shape=jax.ShapeDtypeStruct((B, 1), jnp.float32),
        grid=grid,
        in_specs=[
            pl.BlockSpec((TB, M, W), lambda i: (i, 0, 0)),   # streamed, double-buffered
            pl.BlockSpec((TB, DN), lambda i: (i, 0)),        # streamed mask
            resident(w0p.shape), resident(b0.shape),
            resident(w1.shape), resident(b1.shape),
            resident(wf_t.shape), resident(bf.shape),
        ],
        out_specs=pl.BlockSpec((TB, 1), lambda i: (i, 0)),
        compiler_params=pltpu.CompilerParams(
            dimension_semantics=("parallel",),
            vmem_limit_bytes=VMEM_LIMIT_BYTES),
        cost_estimate=pl.CostEstimate(flops=flops, transcendentals=0,
                                      bytes_accessed=bytes_accessed),
    )(ke, km, w0p, b0, w1, b1, wf_t, bf)

    # cheap elementwise tail in XLA: greater_than() + Exponential log_prob
    bx = SCALE_BETA * un
    sp = jnp.where(bx > SOFTPLUS_THRESHOLD, un,
                   jnp.log1p(jnp.exp(jnp.minimum(bx, SOFTPLUS_THRESHOLD))) / SCALE_BETA)
    nv = SCALE_A * sp + NOISE_VARIANCE_LOWER_BOUND
    lam = NOISE_VARIANCE_EXPONENTIAL_LAMBDA
    lp = jnp.squeeze(jnp.log(lam) - lam * nv, axis=1)
    return nv, un, lp


# ------------------------- deterministic parameter init -----------------------
def init_params(key):
    dims = [KERNEL_EMBEDDING_DIM] + DIM_HIDDEN_LAYER_LIST + [1]
    params = []
    keys = jax.random.split(key, len(dims) - 1)
    for k, (din, dout) in zip(keys, zip(dims[:-1], dims[1:])):
        kw, kb = jax.random.split(k)
        bound = 1.0 / np.sqrt(din)
        w = jax.random.uniform(kw, (din, dout), jnp.float32, -bound, bound)
        b = jax.random.uniform(kb, (1, dout), jnp.float32, -bound, bound)
        params += [w, b]
    return tuple(params)


# ------------------------------ pure-JAX reference -----------------------------
def reference_forward(kernel_embeddings, kernel_mask, params):
    w0, b0, w1, b1, wf, bf = params
    n_kernels = jnp.sum(kernel_mask, axis=(1, 2))[:, None]
    g = jnp.sum(kernel_embeddings, axis=(1, 2)) / n_kernels
    h = jax.nn.relu(g @ w0 + b0)
    h = jax.nn.relu(h @ w1 + b1)
    un = h @ wf + bf
    sp = jnp.where(SCALE_BETA * un > SOFTPLUS_THRESHOLD, un,
                   jnp.log1p(jnp.exp(jnp.minimum(SCALE_BETA * un, SOFTPLUS_THRESHOLD))) / SCALE_BETA)
    nv = SCALE_A * sp + NOISE_VARIANCE_LOWER_BOUND
    lam = NOISE_VARIANCE_EXPONENTIAL_LAMBDA
    lp = jnp.squeeze(jnp.log(lam) - lam * nv, axis=1)
    return nv, un, lp


if __name__ == "__main__":
    key = jax.random.PRNGKey(0)
    k_params, k_emb, k_mask, k_enc = jax.random.split(key, 4)

    B, D, Nk, dh = 2, 4, 8, KERNEL_EMBEDDING_DIM
    hidden_dim = 16

    params = init_params(k_params)

    kernel_embeddings = jax.random.normal(k_emb, (B, D, Nk, dh), jnp.float32)
    # mask: 0/1 float mask, at least one active kernel per (batch, dim)
    kernel_mask = (jax.random.uniform(k_mask, (B, D, Nk)) > 0.3).astype(jnp.float32)
    kernel_mask = kernel_mask.at[:, :, 0].set(1.0)
    dimwise_dataset_encoding = jax.random.normal(k_enc, (B, D, hidden_dim), jnp.float32)
    dim_mask = jnp.ones((B, D), jnp.float32)

    nv, un, lp = noise_variance_predictor_head(
        kernel_embeddings, kernel_mask, dimwise_dataset_encoding, dim_mask, params)
    jax.block_until_ready((nv, un, lp))

    nv_ref, un_ref, lp_ref = reference_forward(kernel_embeddings, kernel_mask, params)
    np.testing.assert_allclose(np.asarray(nv), np.asarray(nv_ref), rtol=1e-5, atol=1e-5)
    np.testing.assert_allclose(np.asarray(un), np.asarray(un_ref), rtol=1e-5, atol=1e-5)
    np.testing.assert_allclose(np.asarray(lp), np.asarray(lp_ref), rtol=1e-5, atol=1e-5)

    assert nv.shape == (B, 1) and un.shape == (B, 1) and lp.shape == (B,)
    print("KERNEL_OK")
</pallas_src>

<mosaic_0001>
module attributes {stable_mosaic.version = 11 : i64} {
  func.func @noise_head_kernel(%arg0: i32, %arg1: memref<2x8x128xf32, #tpu.memory_space<vmem>>, %arg2: memref<2x32xf32, #tpu.memory_space<vmem>>, %arg3: memref<128x32xf32, #tpu.memory_space<vmem>>, %arg4: memref<1x32xf32, #tpu.memory_space<vmem>>, %arg5: memref<32x16xf32, #tpu.memory_space<vmem>>, %arg6: memref<1x16xf32, #tpu.memory_space<vmem>>, %arg7: memref<1x16xf32, #tpu.memory_space<vmem>>, %arg8: memref<1x1xf32, #tpu.memory_space<vmem>>, %arg9: memref<2x1xf32, #tpu.memory_space<vmem>>) attributes {dimension_semantics = [#tpu.dimension_semantics<parallel>], iteration_bounds = array<i64: 1>, scalar_prefetch = 0 : i64, scratch_operands = 0 : i64, tpu.core_type = #tpu.core_type<tc>, window_params = [{transform_indices = @transform_0, window_bounds = array<i64: 2, 8, 128>}, {transform_indices = @transform_1, window_bounds = array<i64: 2, 32>}, {pipeline_mode = #tpu.pipeline_mode<synchronous>, transform_indices = @transform_2, window_bounds = array<i64: 128, 32>}, {pipeline_mode = #tpu.pipeline_mode<synchronous>, transform_indices = @transform_3, window_bounds = array<i64: 1, 32>}, {pipeline_mode = #tpu.pipeline_mode<synchronous>, transform_indices = @transform_4, window_bounds = array<i64: 32, 16>}, {pipeline_mode = #tpu.pipeline_mode<synchronous>, transform_indices = @transform_5, window_bounds = array<i64: 1, 16>}, {pipeline_mode = #tpu.pipeline_mode<synchronous>, transform_indices = @transform_6, window_bounds = array<i64: 1, 16>}, {pipeline_mode = #tpu.pipeline_mode<synchronous>, transform_indices = @transform_7, window_bounds = array<i64: 1, 1>}, {transform_indices = @transform_8, window_bounds = array<i64: 2, 1>}]} {
    %c0 = arith.constant 0 : index
    %c0_0 = arith.constant 0 : index
    %c0_1 = arith.constant 0 : index
    %0 = vector.load %arg1[%c0, %c0_0, %c0_1] : memref<2x8x128xf32, #tpu.memory_space<vmem>>, vector<2x8x128xf32>
    %c0_2 = arith.constant 0 : index
    %c0_3 = arith.constant 0 : index
    %1 = vector.load %arg2[%c0_2, %c0_3] : memref<2x32xf32, #tpu.memory_space<vmem>>, vector<2x32xf32>
    %cst = arith.constant dense<0.000000e+00> : vector<2xf32>
    %2 = vector.multi_reduction <add>, %1, %cst [1] : vector<2x32xf32> to vector<2xf32>
    %3 = vector.shape_cast %2 : vector<2xf32> to vector<2x1xf32>
    %cst_4 = arith.constant 1.000000e+00 : f32
    %4 = vector.broadcast %cst_4 : f32 to vector<2x1xf32>
    %5 = arith.maximumf %3, %4 : vector<2x1xf32>
    %cst_5 = arith.constant dense<0.000000e+00> : vector<2x128xf32>
    %6 = vector.multi_reduction <add>, %0, %cst_5 [1] : vector<2x8x128xf32> to vector<2x128xf32>
    %c0_6 = arith.constant 0 : index
    %c0_7 = arith.constant 0 : index
    %7 = vector.load %arg3[%c0_6, %c0_7] : memref<128x32xf32, #tpu.memory_space<vmem>>, vector<128x32xf32>
    %cst_8 = arith.constant dense<0.000000e+00> : vector<2x32xf32>
    %8 = tpu.matmul %6, %7, %cst_8 {dimension_numbers = #tpu.dot_dimension_numbers<[1], [0], [0], [1], [0, 0, 1, 1], [], []>} : vector<2x128xf32>, vector<128x32xf32>, vector<2x32xf32> -> vector<2x32xf32>
    %9 = vector.broadcast %5 : vector<2x1xf32> to vector<2x32xf32>
    %10 = arith.divf %8, %9 : vector<2x32xf32>
    %c0_9 = arith.constant 0 : index
    %c0_10 = arith.constant 0 : index
    %11 = vector.load %arg4[%c0_9, %c0_10] : memref<1x32xf32, #tpu.memory_space<vmem>>, vector<1x32xf32>
    %12 = vector.broadcast %11 : vector<1x32xf32> to vector<2x32xf32>
    %13 = arith.addf %10, %12 : vector<2x32xf32>
    %cst_11 = arith.constant 0.000000e+00 : f32
    %14 = vector.broadcast %cst_11 : f32 to vector<2x32xf32>
    %15 = arith.maximumf %13, %14 : vector<2x32xf32>
    %c0_12 = arith.constant 0 : index
    %c0_13 = arith.constant 0 : index
    %16 = vector.load %arg5[%c0_12, %c0_13] : memref<32x16xf32, #tpu.memory_space<vmem>>, vector<32x16xf32>
    %cst_14 = arith.constant dense<0.000000e+00> : vector<2x16xf32>
    %17 = tpu.matmul %15, %16, %cst_14 {dimension_numbers = #tpu.dot_dimension_numbers<[1], [0], [0], [1], [0, 0, 1, 1], [], []>} : vector<2x32xf32>, vector<32x16xf32>, vector<2x16xf32> -> vector<2x16xf32>
    %c0_15 = arith.constant 0 : index
    %c0_16 = arith.constant 0 : index
    %18 = vector.load %arg6[%c0_15, %c0_16] : memref<1x16xf32, #tpu.memory_space<vmem>>, vector<1x16xf32>
    %19 = vector.broadcast %18 : vector<1x16xf32> to vector<2x16xf32>
    %20 = arith.addf %17, %19 : vector<2x16xf32>
    %cst_17 = arith.constant 0.000000e+00 : f32
    %21 = vector.broadcast %cst_17 : f32 to vector<2x16xf32>
    %22 = arith.maximumf %20, %21 : vector<2x16xf32>
    %c0_18 = arith.constant 0 : index
    %c0_19 = arith.constant 0 : index
    %23 = vector.load %arg7[%c0_18, %c0_19] : memref<1x16xf32, #tpu.memory_space<vmem>>, vector<1x16xf32>
    %24 = vector.broadcast %23 : vector<1x16xf32> to vector<2x16xf32>
    %25 = arith.mulf %22, %24 : vector<2x16xf32>
    %cst_20 = arith.constant dense<0.000000e+00> : vector<2xf32>
    %26 = vector.multi_reduction <add>, %25, %cst_20 [1] : vector<2x16xf32> to vector<2xf32>
    %27 = vector.shape_cast %26 : vector<2xf32> to vector<2x1xf32>
    %c0_21 = arith.constant 0 : index
    %c0_22 = arith.constant 0 : index
    %28 = vector.load %arg8[%c0_21, %c0_22] : memref<1x1xf32, #tpu.memory_space<vmem>>, vector<1x1xf32>
    %29 = vector.broadcast %28 : vector<1x1xf32> to vector<2x1xf32>
    %30 = arith.addf %27, %29 : vector<2x1xf32>
    %c0_23 = arith.constant 0 : index
    %c0_24 = arith.constant 0 : index
    %31 = vector.load %arg9[%c0_23, %c0_24] : memref<2x1xf32, #tpu.memory_space<vmem>>, vector<2x1xf32>
    tpu.vector_store %arg9[%c0_23, %c0_24], %30 {strides = array<i32>} : memref<2x1xf32, #tpu.memory_space<vmem>>, vector<2x1xf32>,
    return
  }
  func.func @transform_0(%arg0: i32) -> (i32, i32, i32) {
    %c0_i32 = arith.constant 0 : i32
    %c0_i32_0 = arith.constant 0 : i32
    %c0_i32_1 = arith.constant 0 : i32
    return %arg0, %c0_i32, %c0_i32_0 : i32, i32, i32
  }
  func.func @transform_1(%arg0: i32) -> (i32, i32) {
    %c0_i32 = arith.constant 0 : i32
    %c0_i32_0 = arith.constant 0 : i32
    return %arg0, %c0_i32 : i32, i32
  }
  func.func @transform_2(%arg0: i32) -> (i32, i32) {
    %c0_i32 = arith.constant 0 : i32
    %c0_i32_0 = arith.constant 0 : i32
    %c0_i32_1 = arith.constant 0 : i32
    return %c0_i32, %c0_i32_0 : i32, i32
  }
  func.func @transform_3(%arg0: i32) -> (i32, i32) {
    %c0_i32 = arith.constant 0 : i32
    %c0_i32_0 = arith.constant 0 : i32
    %c0_i32_1 = arith.constant 0 : i32
    return %c0_i32, %c0_i32_0 : i32, i32
  }
  func.func @transform_4(%arg0: i32) -> (i32, i32) {
    %c0_i32 = arith.constant 0 : i32
    %c0_i32_0 = arith.constant 0 : i32
    %c0_i32_1 = arith.constant 0 : i32
    return %c0_i32, %c0_i32_0 : i32, i32
  }
  func.func @transform_5(%arg0: i32) -> (i32, i32) {
    %c0_i32 = arith.constant 0 : i32
    %c0_i32_0 = arith.constant 0 : i32
    %c0_i32_1 = arith.constant 0 : i32
    return %c0_i32, %c0_i32_0 : i32, i32
  }
  func.func @transform_6(%arg0: i32) -> (i32, i32) {
    %c0_i32 = arith.constant 0 : i32
    %c0_i32_0 = arith.constant 0 : i32
    %c0_i32_1 = arith.constant 0 : i32
    return %c0_i32, %c0_i32_0 : i32, i32
  }
  func.func @transform_7(%arg0: i32) -> (i32, i32) {
    %c0_i32 = arith.constant 0 : i32
    %c0_i32_0 = arith.constant 0 : i32
    %c0_i32_1 = arith.constant 0 : i32
    return %c0_i32, %c0_i32_0 : i32, i32
  }
  func.func @transform_8(%arg0: i32) -> (i32, i32) {
    %c0_i32 = arith.constant 0 : i32
    %c0_i32_0 = arith.constant 0 : i32
    return %arg0, %c0_i32 : i32, i32
  }
}

</mosaic_0001>

<llo_original>
// kernel: tpu_custom_call.1
$region0: #{tpu_custom_call.1}
  #allocation0 [shape = 'u32[]', space=smem, size = 0x4, offset = 0x4, fixed_abs, tag = 'smem constant byte address 0x4 - core index']
  #allocation1 [shape = 'u32[72,128]{1,0:T(1,128)}', space=vmem, size = 0x9000, scoped, tag = 'internal scratch']
  #allocation2 [shape = 'f32[1,1]{1,0:T(1,128)S(1)}', space=vmem, size = 0x200, scoped, tag = 'scoped memory for tpu_custom_call.1']
  %s0 = inlined_call_operand.vmem [shape: f32[2,8,128], index: 0, kind: input, shape index: {}]
  %s1 = inlined_call_operand.vmem [shape: f32[2,32], index: 1, kind: input, shape index: {}]
  %s2 = inlined_call_operand.vmem [shape: f32[128,32], index: 2, kind: input, shape index: {}]
  %s3 = inlined_call_operand.vmem [shape: f32[1,32], index: 3, kind: input, shape index: {}]
  %s4 = inlined_call_operand.vmem [shape: f32[32,16], index: 4, kind: input, shape index: {}]
  %s5 = inlined_call_operand.vmem [shape: f32[1,16], index: 5, kind: input, shape index: {}]
  %s6 = inlined_call_operand.vmem [shape: f32[1,16], index: 6, kind: input, shape index: {}]
  %s7 = inlined_call_operand.<no memory space> [shape: f32[1,1], index: 7, kind: input, shape index: {}]
  %s8 = inlined_call_operand.vmem [shape: f32[2,1], index: 8, kind: output, shape index: {}]
  %s9 = sld [smem:[#allocation0]]
  $region42: #{tpu_custom_call.1} parent=0
    _
  %s11 = ssub.s32 1, %s9
  %s12 = scalar_select 0, %s11, %s9
  %v13 = vstv %s7
  %14 = vst [vmem:[#allocation2] sm:$0x1] %v13
  // Predicated region
  $region2: #{tpu_custom_call.1} parent=0 // pred_check
    _
  $region3: #{tpu_custom_call.1} parent=0 // pred_check_branch
    %16 = sbr.rel (0) target = $region5
  $region4: #{tpu_custom_call.1} parent=0 // pred_region
    _
  $region5: #{tpu_custom_call.1} parent=0 // pred_fallthru
    _
  // Predicated region
  $region6: #{tpu_custom_call.1} parent=0 // pred_check
    _
  $region7: #{tpu_custom_call.1} parent=0 // pred_check_branch
    %18 = sbr.rel (0) target = $region9
  $region8: #{tpu_custom_call.1} parent=0 // pred_region
    _
  $region9: #{tpu_custom_call.1} parent=0 // pred_fallthru
    _
  // Predicated region
  $region10: #{tpu_custom_call.1} parent=0 // pred_check
    _
  $region11: #{tpu_custom_call.1} parent=0 // pred_check_branch
    %20 = sbr.rel (0) target = $region13
  $region12: #{tpu_custom_call.1} parent=0 // pred_region
    _
  $region13: #{tpu_custom_call.1} parent=0 // pred_fallthru
    _
  // Predicated region
  $region14: #{tpu_custom_call.1} parent=0 // pred_check
    _
  $region15: #{tpu_custom_call.1} parent=0 // pred_check_branch
    %22 = sbr.rel (0) target = $region17
  $region16: #{tpu_custom_call.1} parent=0 // pred_region
    _
  $region17: #{tpu_custom_call.1} parent=0 // pred_fallthru
    _
  // Predicated region
  $region18: #{tpu_custom_call.1} parent=0 // pred_check
    _
  $region19: #{tpu_custom_call.1} parent=0 // pred_check_branch
    %24 = sbr.rel (0) target = $region21
  $region20: #{tpu_custom_call.1} parent=0 // pred_region
    _
  $region21: #{tpu_custom_call.1} parent=0 // pred_fallthru
    _
  // Predicated region
  $region22: #{tpu_custom_call.1} parent=0 // pred_check
    _
  $region23: #{tpu_custom_call.1} parent=0 // pred_check_branch
    %26 = sbr.rel (0) target = $region25
  $region24: #{tpu_custom_call.1} parent=0 // pred_region
    _
  $region25: #{tpu_custom_call.1} parent=0 // pred_fallthru
    _
  // Predicated region
  $region26: #{tpu_custom_call.1} parent=0 // pred_check
    _
  $region27: #{tpu_custom_call.1} parent=0 // pred_check_branch
    %28 = sbr.rel (0) target = $region29
  $region28: #{tpu_custom_call.1} parent=0 // pred_region
    _
  $region29: #{tpu_custom_call.1} parent=0 // pred_fallthru
    _
  // Predicated region
  $region30: #{tpu_custom_call.1} parent=0 // pred_check
    _
  $region31: #{tpu_custom_call.1} parent=0 // pred_check_branch
    %30 = sbr.rel (0) target = $region33
  $region32: #{tpu_custom_call.1} parent=0 // pred_region
    _
  $region33: #{tpu_custom_call.1} parent=0 // pred_fallthru
    _
  %v31 = vld [vmem:[%s0] sm:$0xff]
  %v32 = vld [vmem:[%s0 + $0x8] sm:$0xff]
  %v33 = vld [vmem:[%s1] sm:$0x3]
  %vm34 = vcmask 254976
  %v35 = vsel %vm34, %v33, 0.0
  %36 = vadd.xlane.f32.xlu0 %v35
  %v37 = vpop.xlane.xlu0 %36
  %v38 = vmax.f32 %v37, 1.0
  %v39 = vrot.slane %v31, 4
  %v40 = vadd.f32 %v31, %v39
  %v41 = vrot.slane %v40, 2
  %v42 = vadd.f32 %v40, %v41
  %v43 = vrot.slane %v42, 1
  %v44 = vadd.f32 %v42, %v43
  %v45 = vrot.slane %v32, 4
  %v46 = vadd.f32 %v32, %v45
  %v47 = vrot.slane %v46, 2
  %v48 = vadd.f32 %v46, %v47
  %v49 = vrot.slane %v48, 1
  %v50 = vadd.f32 %v48, %v49
  %v51 = vld [vmem:[%s2] sm:$0xff]
  %v52 = vld [vmem:[%s2 + $0x8] sm:$0xff]
  %v53 = vld [vmem:[%s2 + $0x10] sm:$0xff]
  %v54 = vld [vmem:[%s2 + $0x18] sm:$0xff]
  %v55 = vld [vmem:[%s2 + $0x20] sm:$0xff]
  %v56 = vld [vmem:[%s2 + $0x28] sm:$0xff]
  %v57 = vld [vmem:[%s2 + $0x30] sm:$0xff]
  %v58 = vld [vmem:[%s2 + $0x38] sm:$0xff]
  %v59 = vld [vmem:[%s2 + $0x40] sm:$0xff]
  %v60 = vld [vmem:[%s2 + $0x48] sm:$0xff]
  %v61 = vld [vmem:[%s2 + $0x50] sm:$0xff]
  %v62 = vld [vmem:[%s2 + $0x58] sm:$0xff]
  %v63 = vld [vmem:[%s2 + $0x60] sm:$0xff]
  %v64 = vld [vmem:[%s2 + $0x68] sm:$0xff]
  %v65 = vld [vmem:[%s2 + $0x70] sm:$0xff]
  %v66 = vld [vmem:[%s2 + $0x78] sm:$0xff]
  %vm69 = vcmask 1041409
  %v70 = vsel %vm69, %v50, %v44
  %72 = vmatpush.msra.mxu0 %v66
  %73 = vmatpush.msra.mxu0 %v65
  %74 = vmatpush.msra.mxu0 %v64
  %75 = vmatpush.msra.mxu0 %v63
  %76 = vmatpush.msra.mxu0 %v62
  %77 = vmatpush.msra.mxu0 %v61
  %78 = vmatpush.msra.mxu0 %v60
  %79 = vmatpush.msra.mxu0 %v59
  %80 = vmatpush.msra.mxu0 %v58
  %81 = vmatpush.msra.mxu0 %v57
  %82 = vmatpush.msra.mxu0 %v56
  %83 = vmatpush.msra.mxu0 %v55
  %84 = vmatpush.msra.mxu0 %v54
  %85 = vmatpush.msra.mxu0 %v53
  %86 = vmatpush.msra.mxu0 %v52
  %87 = vmatpush.msra.mxu0 %v51
  %88 = vmatmul.f32.gmra.mxu0 %v70
  %v89 = vpop.f32.mrf.mxu0
  %v90 = vadd.f32 0.0, %v89
  %91 = vdwg.mxu0
  %v92 = vrcp.pop %v38
  %v93 = vmul.f32 %v38, %v92
  %v94 = vsub.f32 1.0, %v93
  %v95 = vmul.f32 %v92, %v94
  %v96 = vadd.f32 %v92, %v95
  %vm97 = vweird.f32 %v38
  %vm98 = vweird.f32 %v92
  %vm99 = vmor %vm97, %vm98
  %v100 = vsel %vm99, %v92, %v96
  %v101 = vand.u32 2147483647, %v38
  %vm102 = vcmp.eq.f32.partialorder %v101, 8.507059e+37
  %v103 = vand.u32 %v38, 2147483648
  %v104 = vor.u32 1.1754944e-38, %v103
  %v105 = vsel %vm102, %v104, %v100
  %v106 = vmul.f32 %v90, %v105
  %v107 = vld [vmem:[%s3] sm:$0x1]
  %v109 = vperm.slane %v107, 0
  %v111 = vadd.f32 %v106, %v109
  %v112 = vmax.f32 %v111, 0.0
  %v113 = vld [vmem:[%s4] sm:$0xff]
  %v114 = vld [vmem:[%s4 + $0x8] sm:$0xff]
  %v115 = vld [vmem:[%s4 + $0x10] sm:$0xff]
  %v116 = vld [vmem:[%s4 + $0x18] sm:$0xff]
  %v117 = vld [vmem:[%s5] sm:$0x1]
  %v119 = vperm.slane %v117, 0
  %vm121 = vcmask 261120
  %v123 = vsel %vm121, %v112, 0
  %125 = vmatpush.msra.mxu0 0.0
  %126 = vmatpush.msra.mxu0 0.0
  %127 = vmatpush.msra.mxu0 0.0
  %128 = vmatpush.msra.mxu0 0.0
  %129 = vmatpush.msra.mxu0 0.0
  %130 = vmatpush.msra.mxu0 0.0
  %131 = vmatpush.msra.mxu0 0.0
  %132 = vmatpush.msra.mxu0 0.0
  %133 = vmatpush.msra.mxu0 0.0
  %134 = vmatpush.msra.mxu0 0.0
  %135 = vmatpush.msra.mxu0 0.0
  %136 = vmatpush.msra.mxu0 0.0
  %137 = vmatpush.msra.mxu0 %v116
  %138 = vmatpush.msra.mxu0 %v115
  %139 = vmatpush.msra.mxu0 %v114
  %140 = vmatpush.msra.mxu0 %v113
  %141 = vmatmul.f32.gmra.mxu0 %v123
  %v142 = vpop.f32.mrf.mxu0
  %v143 = vadd.f32 %v119, %v142
  %144 = vdwg.mxu0
  %v145 = vmax.f32 %v143, 0.0
  %v146 = vld [vmem:[%s6] sm:$0x1]
  %v148 = vperm.slane %v146, 0
  %v150 = vmul.f32 %v145, %v148
  %vm151 = vcmask 123904
  %v152 = vsel %vm151, %v150, 0.0
  %153 = vadd.xlane.f32.xlu0 %v152
  %v154 = vpop.xlane.xlu0 %153
  %v155 = vld [vmem:[#allocation2] sm:$0x1]
  %v157 = vperm.slane %v155, 0
  %v159 = vadd.f32 %v154, %v157
  %vm160 = vcmask 1024
  %161 = vst.msk [vmem:[%s8] sm:$0x3] %vm160, %v159
  // Predicated region
  $region34: #{tpu_custom_call.1} parent=0 // pred_check
    _
  $region35: #{tpu_custom_call.1} parent=0 // pred_check_branch
    %163 = sbr.rel (0) target = $region37
  $region36: #{tpu_custom_call.1} parent=0 // pred_region
    _
  $region37: #{tpu_custom_call.1} parent=0 // pred_fallthru
    _
  // Predicated region
  $region38: #{tpu_custom_call.1} parent=0 // pred_check
    _
  $region39: #{tpu_custom_call.1} parent=0 // pred_check_branch
    %165 = sbr.rel (0) target = $region41
  $region40: #{tpu_custom_call.1} parent=0 // pred_region
    _
  $region41: #{tpu_custom_call.1} parent=0 // pred_fallthru
    _

</llo_original>
